<compile_context>
chip_gen: v7x
topology: tpu7x:2x2x1
jax: 0.10.0
libtpu: 0.0.40
codegen_flags: <defaults>
</compile_context>

<pallas_src>
import functools

import jax
import jax.numpy as jnp
from jax.experimental import pallas as pl
from jax.experimental.pallas import tpu as pltpu


def _in_kernel(eps, hw, tr, resident, x_ref, g_ref, b_ref, o_ref):
    # x_ref: (TR, HW)   g_ref/b_ref: (R,1) if resident else (TR,1)   o_ref: (TR, HW)
    x = x_ref[...].astype(jnp.float32)

    # Fused single-pass statistics: one sweep gives sum and sum-of-squares.
    s = jnp.sum(x, axis=-1, keepdims=True)
    ss = jnp.sum(x * x, axis=-1, keepdims=True)
    mean = s * jnp.float32(1.0 / hw)
    inv_nm1 = 1.0 / (hw - 1) if hw > 1 else float("nan")  # torch.var unbiased default
    var = (ss - s * mean) * jnp.float32(inv_nm1)
    inv_std = jax.lax.rsqrt(var + jnp.float32(eps))

    if resident:
        # gamma/beta were DMA'd into VMEM once for the whole grid; slice our rows.
        r0 = pl.multiple_of(pl.program_id(0) * tr, 8)
        g = g_ref[pl.ds(r0, tr), :]
        b = b_ref[pl.ds(r0, tr), :]
    else:
        g = g_ref[...]
        b = b_ref[...]

    scale = g.astype(jnp.float32) * inv_std           # gamma / sqrt(var + eps)
    shift = b.astype(jnp.float32) - scale * mean      # beta - scale * mean
    o_ref[...] = (x * scale + shift).astype(o_ref.dtype)


def _choose_row_tile(R, HW, itemsize):
    """Pick a row tile: big enough for HBM roofline, small enough for VMEM."""
    if R <= 8:
        return R
    target_block_bytes = 2 << 20      # ~2 MiB x-block -> ~85% of measured HBM roofline
    vmem_cap_bytes = 24 << 20         # budget for double-buffered x + out (v7x-safe)
    tr = max(1, target_block_bytes // (HW * itemsize))
    tr = min(tr, max(1, vmem_cap_bytes // (4 * HW * itemsize)))
    tr = max(8, (tr // 8) * 8)
    tr = min(tr, (R // 8) * 8)
    if R >= 16:
        # keep >= 2 grid steps so v7x's second TensorCore is not idle
        tr = min(tr, max(8, ((R // 2) // 8) * 8))
    return tr


def instance_norm(x, gamma, beta, eps=1e-5):
    """x: (N, C, H, W); gamma, beta: (1, C, 1, 1). Returns (N, C, H, W)."""
    N, C, H, W = x.shape
    R, HW = N * C, H * W
    itemsize = jnp.dtype(x.dtype).itemsize

    x2d = x.reshape(R, HW)
    # broadcast per-channel affine params to one scalar per row (= per instance)
    g_row = jnp.broadcast_to(gamma.reshape(1, C), (N, C)).reshape(R, 1).astype(x.dtype)
    b_row = jnp.broadcast_to(beta.reshape(1, C), (N, C)).reshape(R, 1).astype(x.dtype)

    TR = _choose_row_tile(R, HW, itemsize)
    grid = (pl.cdiv(R, TR),)

    # Keep gamma/beta resident in VMEM (single DMA, constant block index) when
    # TR divides R evenly and the lane-padded footprint stays small.
    resident = (R > TR) and (R % TR == 0) and (R <= 16384)
    if resident:
        p_spec = pl.BlockSpec((R, 1), lambda i: (0, 0))
        p_rows_padded = ((R + 7) // 8) * 8
    else:
        p_spec = pl.BlockSpec((TR, 1), lambda i: (i, 0))
        p_rows_padded = ((TR + 7) // 8) * 8

    # VMEM budget: double-buffered x + out blocks, lane-padded params, headroom.
    x_block_bytes = TR * HW * itemsize
    param_bytes = 2 * 2 * p_rows_padded * 128 * itemsize
    need = 4 * x_block_bytes + param_bytes + (2 << 20)
    vmem_limit = int(min(max(need, 24 << 20), 60 << 20))

    cost = pl.CostEstimate(
        flops=6 * R * HW,
        transcendentals=R,
        bytes_accessed=2 * R * HW * itemsize + 4 * R * itemsize,
    )

    # TODO(synk): for very large H*W (one row >~1.5 MiB) add a column-tiled grid axis with a (TR,1) sum/sumsq VMEM accumulator + pl.when finalize so v7x's 64 MiB VMEM is never exceeded; not needed at these shapes.
    kernel = functools.partial(_in_kernel, float(eps), HW, TR, resident)

    out2d = pl.pallas_call(
        kernel,
        out_shape=jax.ShapeDtypeStruct((R, HW), x.dtype),
        grid_spec=pltpu.PrefetchScalarGridSpec(
            num_scalar_prefetch=0,
            grid=grid,
            in_specs=[
                pl.BlockSpec((TR, HW), lambda i: (i, 0)),
                p_spec,
                p_spec,
            ],
            out_specs=pl.BlockSpec((TR, HW), lambda i: (i, 0)),
        ),
        compiler_params=pltpu.CompilerParams(
            dimension_semantics=("parallel",),
            vmem_limit_bytes=vmem_limit,
        ),
        cost_estimate=cost,
    )(x2d, g_row, b_row)

    return out2d.reshape(N, C, H, W)


def instance_norm_ref(x, gamma, beta, eps=1e-5):
    """Pure-JAX reference mirroring the PyTorch module (torch.var unbiased)."""
    mean = jnp.mean(x, axis=(2, 3), keepdims=True)
    n = x.shape[2] * x.shape[3]
    var = jnp.sum((x - mean) ** 2, axis=(2, 3), keepdims=True) / (n - 1)
    out_in = (x - mean) / jnp.sqrt(var + eps)
    return gamma * out_in + beta


if __name__ == "__main__":
    key = jax.random.PRNGKey(0)
    k1, k2 = jax.random.split(key)

    # Case 1: small demo shape consistent with the module (per-step param path).
    N, C, H, W = 2, 4, 16, 16
    x = jax.random.normal(k1, (N, C, H, W), dtype=jnp.float32)
    gamma = (1.0 + 0.1 * jnp.arange(C, dtype=jnp.float32)).reshape(1, C, 1, 1)
    beta = (0.05 * jnp.arange(C, dtype=jnp.float32)).reshape(1, C, 1, 1)
    out = jax.block_until_ready(instance_norm(x, gamma, beta, eps=1e-5))
    ref = instance_norm_ref(x, gamma, beta, eps=1e-5)
    assert out.shape == (N, C, H, W)
    assert jnp.allclose(out, ref, atol=1e-4, rtol=1e-4)

    # Case 2: larger shape exercising multi-step grid + VMEM-resident params.
    N2, C2, H2, W2 = 4, 16, 32, 32
    x2 = jax.random.normal(k2, (N2, C2, H2, W2), dtype=jnp.float32)
    gamma2 = (1.0 + 0.01 * jnp.arange(C2, dtype=jnp.float32)).reshape(1, C2, 1, 1)
    beta2 = (-0.02 * jnp.arange(C2, dtype=jnp.float32)).reshape(1, C2, 1, 1)
    out2 = jax.block_until_ready(instance_norm(x2, gamma2, beta2, eps=1e-5))
    ref2 = instance_norm_ref(x2, gamma2, beta2, eps=1e-5)
    assert jnp.allclose(out2, ref2, atol=1e-4, rtol=1e-4)

    print("KERNEL_OK")
</pallas_src>

<mosaic_0001>
module attributes {stable_mosaic.version = 11 : i64} {
  func.func @_in_kernel(%arg0: i32, %arg1: memref<8x256xf32, #tpu.memory_space<vmem>>, %arg2: memref<8x1xf32, #tpu.memory_space<vmem>>, %arg3: memref<8x1xf32, #tpu.memory_space<vmem>>, %arg4: memref<8x256xf32, #tpu.memory_space<vmem>>) attributes {dimension_semantics = [#tpu.dimension_semantics<parallel>], iteration_bounds = array<i64: 1>, scalar_prefetch = 0 : i64, scratch_operands = 0 : i64, tpu.core_type = #tpu.core_type<tc>, window_params = [{transform_indices = @transform_0, window_bounds = array<i64: 8, 256>}, {transform_indices = @transform_1, window_bounds = array<i64: 8, 1>}, {transform_indices = @transform_2, window_bounds = array<i64: 8, 1>}, {transform_indices = @transform_3, window_bounds = array<i64: 8, 256>}]} {
    %c0 = arith.constant 0 : index
    %c0_0 = arith.constant 0 : index
    %0 = vector.load %arg1[%c0, %c0_0] : memref<8x256xf32, #tpu.memory_space<vmem>>, vector<8x256xf32>
    %cst = arith.constant dense<0.000000e+00> : vector<8xf32>
    %1 = vector.multi_reduction <add>, %0, %cst [1] : vector<8x256xf32> to vector<8xf32>
    %2 = vector.shape_cast %1 : vector<8xf32> to vector<8x1xf32>
    %3 = arith.mulf %0, %0 : vector<8x256xf32>
    %cst_1 = arith.constant dense<0.000000e+00> : vector<8xf32>
    %4 = vector.multi_reduction <add>, %3, %cst_1 [1] : vector<8x256xf32> to vector<8xf32>
    %5 = vector.shape_cast %4 : vector<8xf32> to vector<8x1xf32>
    %cst_2 = arith.constant 3.906250e-03 : f32
    %6 = vector.broadcast %cst_2 : f32 to vector<8x1xf32>
    %7 = arith.mulf %2, %6 : vector<8x1xf32>
    %8 = arith.mulf %2, %7 : vector<8x1xf32>
    %9 = arith.subf %5, %8 : vector<8x1xf32>
    %cst_3 = arith.constant 0.00392156886 : f32
    %10 = vector.broadcast %cst_3 : f32 to vector<8x1xf32>
    %11 = arith.mulf %9, %10 : vector<8x1xf32>
    %cst_4 = arith.constant 9.99999974E-6 : f32
    %12 = vector.broadcast %cst_4 : f32 to vector<8x1xf32>
    %13 = arith.addf %11, %12 : vector<8x1xf32>
    %14 = math.rsqrt %13 : vector<8x1xf32>
    %c0_5 = arith.constant 0 : index
    %c0_6 = arith.constant 0 : index
    %15 = vector.load %arg2[%c0_5, %c0_6] : memref<8x1xf32, #tpu.memory_space<vmem>>, vector<8x1xf32>
    %c0_7 = arith.constant 0 : index
    %c0_8 = arith.constant 0 : index
    %16 = vector.load %arg3[%c0_7, %c0_8] : memref<8x1xf32, #tpu.memory_space<vmem>>, vector<8x1xf32>
    %17 = arith.mulf %15, %14 : vector<8x1xf32>
    %18 = arith.mulf %17, %7 : vector<8x1xf32>
    %19 = arith.subf %16, %18 : vector<8x1xf32>
    %20 = vector.broadcast %17 : vector<8x1xf32> to vector<8x256xf32>
    %21 = arith.mulf %0, %20 : vector<8x256xf32>
    %22 = vector.broadcast %19 : vector<8x1xf32> to vector<8x256xf32>
    %23 = arith.addf %21, %22 : vector<8x256xf32>
    %c0_9 = arith.constant 0 : index
    %c0_10 = arith.constant 0 : index
    %24 = vector.load %arg4[%c0_9, %c0_10] : memref<8x256xf32, #tpu.memory_space<vmem>>, vector<8x256xf32>
    tpu.vector_store %arg4[%c0_9, %c0_10], %23 {strides = array<i32>} : memref<8x256xf32, #tpu.memory_space<vmem>>, vector<8x256xf32>,
    return
  }
  func.func @transform_0(%arg0: i32) -> (i32, i32) {
    %c0_i32 = arith.constant 0 : i32
    %c0_i32_0 = arith.constant 0 : i32
    return %arg0, %c0_i32 : i32, i32
  }
  func.func @transform_1(%arg0: i32) -> (i32, i32) {
    %c0_i32 = arith.constant 0 : i32
    %c0_i32_0 = arith.constant 0 : i32
    return %arg0, %c0_i32 : i32, i32
  }
  func.func @transform_2(%arg0: i32) -> (i32, i32) {
    %c0_i32 = arith.constant 0 : i32
    %c0_i32_0 = arith.constant 0 : i32
    return %arg0, %c0_i32 : i32, i32
  }
  func.func @transform_3(%arg0: i32) -> (i32, i32) {
    %c0_i32 = arith.constant 0 : i32
    %c0_i32_0 = arith.constant 0 : i32
    return %arg0, %c0_i32 : i32, i32
  }
}

</mosaic_0001>

<llo_original>
// kernel: tpu_custom_call.1
$region0: #{tpu_custom_call.1}
  #allocation0 [shape = 'u32[]', space=smem, size = 0x4, offset = 0x4, fixed_abs, tag = 'smem constant byte address 0x4 - core index']
  #allocation1 [shape = 'u32[144,128]{1,0:T(1,128)}', space=vmem, size = 0x12000, scoped, tag = 'internal scratch']
  %s0 = inlined_call_operand.vmem [shape: f32[8,256], index: 0, kind: input, shape index: {}]
  %s1 = inlined_call_operand.vmem [shape: f32[8,1], index: 1, kind: input, shape index: {}]
  %s2 = inlined_call_operand.vmem [shape: f32[8,1], index: 2, kind: input, shape index: {}]
  %s3 = inlined_call_operand.hbm [shape: f32[8,256], index: 3, kind: output, shape index: {}]
  %s4 = sld [smem:[#allocation0]]
  $region22: #{tpu_custom_call.1} parent=0
    _
  %s6 = ssub.s32 1, %s4
  %s7 = scalar_select 0, %s6, %s4
  $region1: #{tpu_custom_call.1} parent=0
    #allocation2 [shape = 'u8[8192]{0}', space=vmem, size = 0x2000, scoped, tag = 'output window, operand 0, single buffered']
    #allocation3 [shape = 's32[1]{0}', space=sflag, size = 0x4, scoped, tag = 'scoped memory for tpu_custom_call.1']
    %8 = vsyncpa [#allocation3], 0
    // Predicated region
    $region2: #{tpu_custom_call.1} parent=1 // pred_check
      _
    $region3: #{tpu_custom_call.1} parent=1 // pred_check_branch
      %10 = sbr.rel (0) target = $region5
    $region4: #{tpu_custom_call.1} parent=1 // pred_region
      _
    $region5: #{tpu_custom_call.1} parent=1 // pred_fallthru
      _
    // Predicated region
    $region6: #{tpu_custom_call.1} parent=1 // pred_check
      _
    $region7: #{tpu_custom_call.1} parent=1 // pred_check_branch
      %12 = sbr.rel (0) target = $region9
    $region8: #{tpu_custom_call.1} parent=1 // pred_region
      _
    $region9: #{tpu_custom_call.1} parent=1 // pred_fallthru
      _
    // Predicated region
    $region10: #{tpu_custom_call.1} parent=1 // pred_check
      _
    $region11: #{tpu_custom_call.1} parent=1 // pred_check_branch
      %14 = sbr.rel (0) target = $region13
    $region12: #{tpu_custom_call.1} parent=1 // pred_region
      _
    $region13: #{tpu_custom_call.1} parent=1 // pred_fallthru
      _
    %v15 = vld [vmem:[%s0] sm:$0xff]
    %v16 = vld [vmem:[%s0 + $0x8] sm:$0xff]
    %v17 = vadd.f32 %v15, %v16
    %18 = vadd.xlane.f32.xlu0 %v17
    %v19 = vpop.xlane.xlu0 %18
    %v20 = vmul.f32 %v15, %v15
    %v21 = vmul.f32 %v16, %v16
    %v22 = vadd.f32 %v20, %v21
    %23 = vadd.xlane.f32.xlu0 %v22
    %v24 = vpop.xlane.xlu0 %23
    %v25 = vmul.f32 %v19, 0.00390625
    %v26 = vmul.f32 %v19, %v25
    %v27 = vsub.f32 %v24, %v26
    %v28 = vmul.f32 %v27, 0.003921569
    %v29 = vadd.f32 %v28, 1e-05
    %v30 = vrsqrt.pop %v29
    %v31 = vld [vmem:[%s1] sm:$0xff]
    %v32 = vld [vmem:[%s2] sm:$0xff]
    %v33 = vmul.f32 %v31, %v30
    %v34 = vmul.f32 %v33, %v25
    %v35 = vsub.f32 %v32, %v34
    %37 = vset.pattern.permute.xlu0 0
    %38 = vperm.xlu0 %37, %v33
    %v39 = vpop.permute.xlu0 %38
    %v41 = vmul.f32 %v15, %v39
    %v42 = vmul.f32 %v16, %v39
    %44 = vset.pattern.permute.xlu0 0
    %45 = vperm.xlu0 %44, %v35
    %v46 = vpop.permute.xlu0 %45
    %v48 = vadd.f32 %v41, %v46
    %v49 = vadd.f32 %v42, %v46
    %50 = vst [vmem:[#allocation2] sm:$0xff] %v48
    %51 = vst [vmem:[#allocation2 + $0x8] sm:$0xff] %v49
    // Predicated region
    $region14: #{tpu_custom_call.1} parent=1 // pred_check
      _
    $region15: #{tpu_custom_call.1} parent=1 // pred_check_branch
      %53 = sbr.rel (0) target = $region17
    $region16: #{tpu_custom_call.1} parent=1 // pred_region
      %s55 = ssub.s32 256, 256
      %56 = vsyncadd [#allocation3], %s55
      %s58 = sshll.u32 [#allocation2], 4
      %s59 = int_to_ptr.vmem [resolvable:$true] %s58
      %61 = dma.vmem_to_hbm [thread:$0]  %s59, 256, %s3, [#allocation3]
    $region17: #{tpu_custom_call.1} parent=1 // pred_fallthru
      _
    // Predicated region
    $region18: #{tpu_custom_call.1} parent=1 // pred_check
      _
    $region19: #{tpu_custom_call.1} parent=1 // pred_check_branch
      %63 = sbr.rel (0) target = $region21
    $region20: #{tpu_custom_call.1} parent=1 // pred_region
      %64 = dma.done [#allocation3], 256
    $region21: #{tpu_custom_call.1} parent=1 // pred_fallthru
      _
    %65 = vsyncpa [#allocation3], 1

</llo_original>
